<compile_context>
chip_gen: v5e
topology: v5e:2x2
jax: 0.10.0
libtpu: 0.0.40
codegen_flags: <defaults>
</compile_context>

<pallas_src>
import functools

import jax
import jax.numpy as jnp
from jax.experimental import pallas as pl
from jax.experimental.pallas import tpu as pltpu


def _round_up(x: int, m: int) -> int:
    return ((x + m - 1) // m) * m


def _round_down(x: int, m: int) -> int:
    return (x // m) * m


def _vmem_capacity_bytes() -> int:
    try:
        info = pltpu.get_tpu_info()
        cap = getattr(info, "vmem_capacity_bytes", None)
        if cap:
            return int(cap)
    except Exception:
        pass
    return 64 << 20  # conservative default (v7x-sized VMEM)


def _linear_flatten_kernel(*refs, n_layers, inv_s, rows_last):
    """refs = (x, w_0, b_0, ..., w_{L-1}, b_{L-1}, out, acc_scratch)."""
    x_ref = refs[0]
    wb_refs = refs[1:1 + 2 * n_layers]
    o_ref = refs[1 + 2 * n_layers]
    acc_ref = refs[2 + 2 * n_layers]

    s = pl.program_id(1)
    last = pl.num_programs(1) - 1

    @pl.when(s == 0)
    def _():
        acc_ref[...] = jnp.zeros_like(acc_ref)

    if rows_last is None:
        # Every streamed S tile is fully in-bounds: plain running sum.
        acc_ref[...] += jnp.sum(x_ref[...].astype(jnp.float32), axis=1)
    else:
        # Last S tile is partial: its out-of-range rows are undefined (no
        # wrapper-side zero padding) and MUST be masked before the sum.
        @pl.when(s != last)
        def _():
            acc_ref[...] += jnp.sum(x_ref[...].astype(jnp.float32), axis=1)

        @pl.when(s == last)
        def _():
            xv = x_ref[...].astype(jnp.float32)
            row_ids = jax.lax.broadcasted_iota(jnp.int32, x_ref.shape, 1)
            xv = jnp.where(row_ids < rows_last, xv, 0.0)
            acc_ref[...] += jnp.sum(xv, axis=1)

    @pl.when(s == last)
    def _():
        h = acc_ref[...] * inv_s                        # mean over the real S
        for i in range(n_layers):
            w = wb_refs[2 * i][...]
            b = wb_refs[2 * i + 1][...]
            h = jnp.dot(h, w, preferred_element_type=jnp.float32) + b
            if i < n_layers - 1:
                h = jnp.maximum(h, 0.0)
        o_ref[...] = h.astype(o_ref.dtype)


def linear_flatten(x, params, *, tb=None, ts=None):
    """x: (B, S, E); params: list of (W_i, b_i), W_i: (in_i, out_i) -> (B, out_last)."""
    B, S, E = x.shape
    n_layers = len(params)
    assert n_layers >= 1
    assert params[0][0].shape[0] == E
    out_dim = params[-1][0].shape[1]
    itemsize = jnp.dtype(x.dtype).itemsize

    # ---- lane-dense fold of the small E dim into 128 lanes (free reshape). ----
    fold = 128 // E if (E <= 128 and 128 % E == 0) else 1
    if fold > 1 and S % fold != 0:
        fold = 1                      # keep the zero-copy reshape; stream E-wide
    xs = x.reshape(B, S // fold, fold * E) if fold > 1 else x
    Sf = xs.shape[1]                  # streamed (folded) row count
    W = xs.shape[2]                   # streamed minor width (128 when folded)
    lane_w = _round_up(W, 128)        # physical lane footprint of a streamed tile

    # ---- pad weights/biases to lane-dense MXU shapes (tiny, one-off). ----
    w_list, b_list = [], []
    prev_p = W
    for i, (w, b) in enumerate(params):
        if i == 0 and fold > 1:
            # Vertically stacking W1 sums the fold lane-groups of the folded
            # accumulator:  acc @ vstack([W1]*fold) == sum_S(x) @ W1.
            w = jnp.tile(w, (fold, 1))
        din, dout = w.shape
        dout_p = _round_up(dout, 128)
        w = jnp.pad(w, ((0, prev_p - din), (0, dout_p - dout)))
        b = jnp.pad(jnp.reshape(b, (1, dout)), ((0, 0), (0, dout_p - dout)))
        w_list.append(w)
        b_list.append(b)
        prev_p = dout_p
    out_p = prev_p

    # ---- tile sizes (never exceed the real dims; cdiv grid + in-kernel mask). ----
    if tb is None:
        if B <= 8:
            tb = B
        else:
            # Prefer >=2 B-programs so the second TensorCore (v7x) has work.
            tb = max(8, min(128, _round_down(B // 2, 8)))
    if ts is None:
        sub = 8 if itemsize >= 4 else (16 if itemsize == 2 else 32)
        if Sf <= sub:
            ts = Sf
        else:
            vmem_cap = _vmem_capacity_bytes()
            target = (8 << 20) if vmem_cap <= (64 << 20) else (24 << 20)
            ts_cap = max(sub, _round_down(target // (tb * lane_w * itemsize), sub))
            ts = min(ts_cap, _round_down(Sf, sub))

    grid = (pl.cdiv(B, tb), pl.cdiv(Sf, ts))
    num_s = grid[1]
    rows_last = Sf - (num_s - 1) * ts
    if rows_last == ts:
        rows_last = None              # all S tiles full -> no masking needed

    # ---- VMEM budget (accounts for lane padding of the streamed tile). ----
    x_buf = tb * ts * lane_w * itemsize
    w_bytes = sum(int(a.size) * jnp.dtype(a.dtype).itemsize
                  for a in (*w_list, *b_list))
    out_buf = tb * out_p * itemsize
    acc_buf = tb * lane_w * 4
    vmem_limit = 2 * x_buf + 2 * w_bytes + 2 * out_buf + acc_buf + (2 << 20)
    vmem_limit = int(min(max(vmem_limit, 16 << 20),
                         (_vmem_capacity_bytes() * 3) // 4))

    in_specs = [pl.BlockSpec((tb, ts, W), lambda b, s: (b, s, 0))]   # streamed x
    flat_wb = []
    for w, bias in zip(w_list, b_list):
        in_specs.append(pl.BlockSpec(w.shape, lambda b, s: (0, 0)))     # resident W
        in_specs.append(pl.BlockSpec(bias.shape, lambda b, s: (0, 0)))  # resident b
        flat_wb.extend((w, bias))

    kernel = functools.partial(
        _linear_flatten_kernel,
        n_layers=n_layers, inv_s=1.0 / S, rows_last=rows_last)

    out_padded = pl.pallas_call(
        kernel,
        out_shape=jax.ShapeDtypeStruct((B, out_p), x.dtype),
        grid_spec=pltpu.PrefetchScalarGridSpec(
            num_scalar_prefetch=0,
            grid=grid,
            in_specs=in_specs,
            out_specs=pl.BlockSpec((tb, out_p), lambda b, s: (b, 0)),
            scratch_shapes=[pltpu.VMEM((tb, W), jnp.float32)],
        ),
        compiler_params=pltpu.CompilerParams(
            dimension_semantics=("parallel", "arbitrary"),
            vmem_limit_bytes=vmem_limit,
        ),
    )(xs, *flat_wb)

    return out_padded[:, :out_dim]


def reference(x, params):
    h = jnp.mean(x.astype(jnp.float32), axis=1)
    for i, (w, b) in enumerate(params):
        h = h @ w + b.reshape(1, -1)
        if i < len(params) - 1:
            h = jnp.maximum(h, 0.0)
    return h.astype(x.dtype)


if __name__ == "__main__":
    key = jax.random.PRNGKey(0)
    kx1, kx2, kx3, kp, kp2 = jax.random.split(key, 5)

    # Shapes implied by the module: embed_dim=32, hidden_dim=[64], out_features=16.
    E, H, O = 32, 64, 16

    def make_linear(k, din, dout):
        kw, kb = jax.random.split(k)
        lim = 1.0 / (din ** 0.5)
        w = jax.random.uniform(kw, (din, dout), jnp.float32, -lim, lim)
        b = jax.random.uniform(kb, (dout,), jnp.float32, -lim, lim)
        return w, b

    k1, k2 = jax.random.split(kp)
    params = [make_linear(k1, E, H), make_linear(k2, H, O)]   # hidden_dim=[64]

    tol = dict(atol=2e-3, rtol=2e-3)   # covers MXU default-precision rounding

    # Case 1: tiny (B=2, S=8) -- single grid step, lane-dense fold (S % 4 == 0).
    x1 = jax.random.normal(kx1, (2, 8, E), dtype=jnp.float32)
    out1 = jax.block_until_ready(linear_flatten(x1, params))
    assert out1.shape == (2, O), out1.shape
    assert jnp.allclose(out1, reference(x1, params), **tol), "mismatch (case 1)"

    # Case 2: multi-tile grid, S-remainder masking, partial B edge block,
    # non-folded (E-wide) stream path (S % 4 != 0).
    x2 = jax.random.normal(kx2, (10, 23, E), dtype=jnp.float32)
    out2 = jax.block_until_ready(linear_flatten(x2, params, tb=8, ts=8))
    assert out2.shape == (10, O), out2.shape
    assert jnp.allclose(out2, reference(x2, params), **tol), "mismatch (case 2)"

    # Case 3: folded path with multiple S tiles + masking, and hidden_dim=[]
    # (a single Linear after the mean, the module's default config).
    params3 = [make_linear(kp2, E, O)]
    x3 = jax.random.normal(kx3, (9, 40, E), dtype=jnp.float32)
    out3 = jax.block_until_ready(linear_flatten(x3, params3, tb=8, ts=8))
    assert out3.shape == (9, O), out3.shape
    assert jnp.allclose(out3, reference(x3, params3), **tol), "mismatch (case 3)"

    print("KERNEL_OK")
</pallas_src>

<mosaic_0001>
module attributes {stable_mosaic.version = 11 : i64} {
  func.func @_linear_flatten_kernel(%arg0: i32, %arg1: i32, %arg2: memref<2x2x128xf32, #tpu.memory_space<vmem>>, %arg3: memref<128x128xf32, #tpu.memory_space<vmem>>, %arg4: memref<1x128xf32, #tpu.memory_space<vmem>>, %arg5: memref<128x128xf32, #tpu.memory_space<vmem>>, %arg6: memref<1x128xf32, #tpu.memory_space<vmem>>, %arg7: memref<2x128xf32, #tpu.memory_space<vmem>>, %arg8: memref<2x128xf32, #tpu.memory_space<vmem>>) attributes {dimension_semantics = [#tpu.dimension_semantics<parallel>, #tpu.dimension_semantics<arbitrary>], iteration_bounds = array<i64: 1, 1>, scalar_prefetch = 0 : i64, scratch_operands = 1 : i64, tpu.core_type = #tpu.core_type<tc>, window_params = [{transform_indices = @transform_0, window_bounds = array<i64: 2, 2, 128>}, {pipeline_mode = #tpu.pipeline_mode<synchronous>, transform_indices = @transform_1, window_bounds = array<i64: 128, 128>}, {pipeline_mode = #tpu.pipeline_mode<synchronous>, transform_indices = @transform_2, window_bounds = array<i64: 1, 128>}, {pipeline_mode = #tpu.pipeline_mode<synchronous>, transform_indices = @transform_3, window_bounds = array<i64: 128, 128>}, {pipeline_mode = #tpu.pipeline_mode<synchronous>, transform_indices = @transform_4, window_bounds = array<i64: 1, 128>}, {transform_indices = @transform_5, window_bounds = array<i64: 2, 128>}]} {
    %c0_i32 = arith.constant 0 : i32
    %0 = arith.cmpi eq, %arg1, %c0_i32 : i32
    %1 = arith.extui %0 : i1 to i32
    %c0_i32_0 = arith.constant 0 : i32
    %2 = arith.cmpi ne, %1, %c0_i32_0 : i32
    scf.if %2 {
      %cst_9 = arith.constant 0.000000e+00 : f32
      %11 = vector.broadcast %cst_9 : f32 to vector<2x128xf32>
      %c0_10 = arith.constant 0 : index
      %c0_11 = arith.constant 0 : index
      %12 = vector.load %arg8[%c0_10, %c0_11] : memref<2x128xf32, #tpu.memory_space<vmem>>, vector<2x128xf32>
      tpu.vector_store %arg8[%c0_10, %c0_11], %11 {strides = array<i32>} : memref<2x128xf32, #tpu.memory_space<vmem>>, vector<2x128xf32>,
    } else {
    }
    %c0 = arith.constant 0 : index
    %c0_1 = arith.constant 0 : index
    %3 = vector.load %arg8[%c0, %c0_1] : memref<2x128xf32, #tpu.memory_space<vmem>>, vector<2x128xf32>
    %c0_2 = arith.constant 0 : index
    %c0_3 = arith.constant 0 : index
    %c0_4 = arith.constant 0 : index
    %4 = vector.load %arg2[%c0_2, %c0_3, %c0_4] : memref<2x2x128xf32, #tpu.memory_space<vmem>>, vector<2x2x128xf32>
    %cst = arith.constant dense<0.000000e+00> : vector<2x128xf32>
    %5 = vector.multi_reduction <add>, %4, %cst [1] : vector<2x2x128xf32> to vector<2x128xf32>
    %6 = arith.addf %3, %5 : vector<2x128xf32>
    %c0_5 = arith.constant 0 : index
    %c0_6 = arith.constant 0 : index
    %7 = vector.load %arg8[%c0_5, %c0_6] : memref<2x128xf32, #tpu.memory_space<vmem>>, vector<2x128xf32>
    tpu.vector_store %arg8[%c0_5, %c0_6], %6 {strides = array<i32>} : memref<2x128xf32, #tpu.memory_space<vmem>>, vector<2x128xf32>,
    %c0_i32_7 = arith.constant 0 : i32
    %8 = arith.cmpi eq, %arg1, %c0_i32_7 : i32
    %9 = arith.extui %8 : i1 to i32
    %c0_i32_8 = arith.constant 0 : i32
    %10 = arith.cmpi ne, %9, %c0_i32_8 : i32
    scf.if %10 {
      %c0_9 = arith.constant 0 : index
      %c0_10 = arith.constant 0 : index
      %11 = vector.load %arg8[%c0_9, %c0_10] : memref<2x128xf32, #tpu.memory_space<vmem>>, vector<2x128xf32>
      %cst_11 = arith.constant 1.250000e-01 : f32
      %12 = vector.broadcast %cst_11 : f32 to vector<2x128xf32>
      %13 = arith.mulf %11, %12 : vector<2x128xf32>
      %c0_12 = arith.constant 0 : index
      %c0_13 = arith.constant 0 : index
      %14 = vector.load %arg3[%c0_12, %c0_13] : memref<128x128xf32, #tpu.memory_space<vmem>>, vector<128x128xf32>
      %c0_14 = arith.constant 0 : index
      %c0_15 = arith.constant 0 : index
      %15 = vector.load %arg4[%c0_14, %c0_15] : memref<1x128xf32, #tpu.memory_space<vmem>>, vector<1x128xf32>
      %cst_16 = arith.constant dense<0.000000e+00> : vector<2x128xf32>
      %16 = tpu.matmul %13, %14, %cst_16 {dimension_numbers = #tpu.dot_dimension_numbers<[1], [0], [0], [1], [0, 0, 1, 1], [], []>} : vector<2x128xf32>, vector<128x128xf32>, vector<2x128xf32> -> vector<2x128xf32>
      %17 = vector.broadcast %15 : vector<1x128xf32> to vector<2x128xf32>
      %18 = arith.addf %16, %17 : vector<2x128xf32>
      %cst_17 = arith.constant 0.000000e+00 : f32
      %19 = vector.broadcast %cst_17 : f32 to vector<2x128xf32>
      %20 = arith.maximumf %18, %19 : vector<2x128xf32>
      %c0_18 = arith.constant 0 : index
      %c0_19 = arith.constant 0 : index
      %21 = vector.load %arg5[%c0_18, %c0_19] : memref<128x128xf32, #tpu.memory_space<vmem>>, vector<128x128xf32>
      %c0_20 = arith.constant 0 : index
      %c0_21 = arith.constant 0 : index
      %22 = vector.load %arg6[%c0_20, %c0_21] : memref<1x128xf32, #tpu.memory_space<vmem>>, vector<1x128xf32>
      %cst_22 = arith.constant dense<0.000000e+00> : vector<2x128xf32>
      %23 = tpu.matmul %20, %21, %cst_22 {dimension_numbers = #tpu.dot_dimension_numbers<[1], [0], [0], [1], [0, 0, 1, 1], [], []>} : vector<2x128xf32>, vector<128x128xf32>, vector<2x128xf32> -> vector<2x128xf32>
      %24 = vector.broadcast %22 : vector<1x128xf32> to vector<2x128xf32>
      %25 = arith.addf %23, %24 : vector<2x128xf32>
      %c0_23 = arith.constant 0 : index
      %c0_24 = arith.constant 0 : index
      %26 = vector.load %arg7[%c0_23, %c0_24] : memref<2x128xf32, #tpu.memory_space<vmem>>, vector<2x128xf32>
      tpu.vector_store %arg7[%c0_23, %c0_24], %25 {strides = array<i32>} : memref<2x128xf32, #tpu.memory_space<vmem>>, vector<2x128xf32>,
    } else {
    }
    return
  }
  func.func @transform_0(%arg0: i32, %arg1: i32) -> (i32, i32, i32) {
    %c0_i32 = arith.constant 0 : i32
    %c0_i32_0 = arith.constant 0 : i32
    return %arg0, %arg1, %c0_i32 : i32, i32, i32
  }
  func.func @transform_1(%arg0: i32, %arg1: i32) -> (i32, i32) {
    %c0_i32 = arith.constant 0 : i32
    %c0_i32_0 = arith.constant 0 : i32
    %c0_i32_1 = arith.constant 0 : i32
    return %c0_i32, %c0_i32_0 : i32, i32
  }
  func.func @transform_2(%arg0: i32, %arg1: i32) -> (i32, i32) {
    %c0_i32 = arith.constant 0 : i32
    %c0_i32_0 = arith.constant 0 : i32
    %c0_i32_1 = arith.constant 0 : i32
    return %c0_i32, %c0_i32_0 : i32, i32
  }
  func.func @transform_3(%arg0: i32, %arg1: i32) -> (i32, i32) {
    %c0_i32 = arith.constant 0 : i32
    %c0_i32_0 = arith.constant 0 : i32
    %c0_i32_1 = arith.constant 0 : i32
    return %c0_i32, %c0_i32_0 : i32, i32
  }
  func.func @transform_4(%arg0: i32, %arg1: i32) -> (i32, i32) {
    %c0_i32 = arith.constant 0 : i32
    %c0_i32_0 = arith.constant 0 : i32
    %c0_i32_1 = arith.constant 0 : i32
    return %c0_i32, %c0_i32_0 : i32, i32
  }
  func.func @transform_5(%arg0: i32, %arg1: i32) -> (i32, i32) {
    %c0_i32 = arith.constant 0 : i32
    %c0_i32_0 = arith.constant 0 : i32
    return %arg0, %c0_i32 : i32, i32
  }
}

</mosaic_0001>

<llo_original>
// kernel: tpu_custom_call.1
$region0: #{tpu_custom_call.1}
  #allocation0 [shape = 'u32[]', space=smem, size = 0x4, offset = 0x4, fixed_abs, tag = 'smem constant byte address 0x4 - core index']
  #allocation1 [shape = 'u32[72,128]{1,0:T(1,128)}', space=vmem, size = 0x9000, scoped, tag = 'internal scratch']
  #allocation2 [shape = 'f32[2,128]{1,0:T(2,128)}', space=vmem, size = 0x400, scoped, tag = 'scratch operand']
  %s0 = inlined_call_operand.hbm [shape: f32[2,2,128], index: 0, kind: input, shape index: {}]
  %s1 = inlined_call_operand.hbm [shape: f32[128,128], index: 1, kind: input, shape index: {}]
  %s2 = inlined_call_operand.vmem [shape: f32[1,128], index: 2, kind: input, shape index: {}]
  %s3 = inlined_call_operand.hbm [shape: f32[128,128], index: 3, kind: input, shape index: {}]
  %s4 = inlined_call_operand.vmem [shape: f32[1,128], index: 4, kind: input, shape index: {}]
  %s5 = inlined_call_operand.hbm [shape: f32[2,128], index: 5, kind: output, shape index: {}]
  %s6 = sld [smem:[#allocation0]]
  $region50: #{tpu_custom_call.1} parent=0
    _
  %s8 = ssub.s32 1, %s6
  %s9 = scalar_select 0, %s8, %s6
  $region1: #{tpu_custom_call.1} parent=0
    #allocation3 [shape = 'u8[2048]{0}', space=vmem, size = 0x800, scoped, tag = 'input window, operand 0, single buffered']
    #allocation4 [shape = 's32[1]{0}', space=sflag, size = 0x4, scoped, tag = 'scoped memory for tpu_custom_call.1']
    #allocation5 [shape = 's32[1]{0}', space=sflag, size = 0x4, scoped, tag = 'scoped memory for tpu_custom_call.1']
    #allocation6 [shape = 'u8[65536]{0}', space=vmem, size = 0x10000, scoped, tag = 'input window, operand 1, single buffered']
    #allocation7 [shape = 's32[1]{0}', space=sflag, size = 0x4, scoped, tag = 'scoped memory for tpu_custom_call.1']
    #allocation8 [shape = 'u8[65536]{0}', space=vmem, size = 0x10000, scoped, tag = 'input window, operand 3, single buffered']
    #allocation9 [shape = 'u8[1024]{0}', space=vmem, size = 0x400, scoped, tag = 'output window, operand 0, single buffered']
    %10 = vsyncpa [#allocation4], 0
    %11 = vsyncpa [#allocation7], 0
    %12 = vsyncpa [#allocation5], 0
    // Predicated region
    $region2: #{tpu_custom_call.1} parent=1 // pred_check
      _
    $region3: #{tpu_custom_call.1} parent=1 // pred_check_branch
      %14 = sbr.rel (0) target = $region5
    $region4: #{tpu_custom_call.1} parent=1 // pred_region
      %16 = vsyncadd [#allocation4], 0
      %s17 = sshll.u32 %s0, 4
      %s18 = int_to_ptr.hbm [resolvable:$true] %s17
      %s19 = sshll.u32 [#allocation3], 4
      %s20 = int_to_ptr.vmem [resolvable:$true] %s19
      %25 = dma.hbm_to_vmem [thread:$0]  %s18, 64, %s20, [#allocation4], 32, 32, 2
    $region5: #{tpu_custom_call.1} parent=1 // pred_fallthru
      _
    // Predicated region
    $region6: #{tpu_custom_call.1} parent=1 // pred_check
      _
    $region7: #{tpu_custom_call.1} parent=1 // pred_check_branch
      %27 = sbr.rel (0) target = $region9
    $region8: #{tpu_custom_call.1} parent=1 // pred_region
      %29 = vsyncadd [#allocation7], 0
      %s30 = sshll.u32 %s1, 4
      %s31 = int_to_ptr.hbm [resolvable:$true] %s30
      %s32 = sshll.u32 [#allocation6], 4
      %s33 = int_to_ptr.vmem [resolvable:$true] %s32
      %38 = dma.hbm_to_vmem [thread:$0]  %s31, 2048, %s33, [#allocation7], 128, 128, 8
    $region9: #{tpu_custom_call.1} parent=1 // pred_fallthru
      _
    // Predicated region
    $region10: #{tpu_custom_call.1} parent=1 // pred_check
      _
    $region11: #{tpu_custom_call.1} parent=1 // pred_check_branch
      %40 = sbr.rel (0) target = $region13
    $region12: #{tpu_custom_call.1} parent=1 // pred_region
      _
    $region13: #{tpu_custom_call.1} parent=1 // pred_fallthru
      _
    // Predicated region
    $region14: #{tpu_custom_call.1} parent=1 // pred_check
      _
    $region15: #{tpu_custom_call.1} parent=1 // pred_check_branch
      %42 = sbr.rel (0) target = $region17
    $region16: #{tpu_custom_call.1} parent=1 // pred_region
      %44 = vsyncadd [#allocation7], 0
      %s45 = sshll.u32 %s3, 4
      %s46 = int_to_ptr.hbm [resolvable:$true] %s45
      %s47 = sshll.u32 [#allocation8], 4
      %s48 = int_to_ptr.vmem [resolvable:$true] %s47
      %53 = dma.hbm_to_vmem [thread:$0]  %s46, 2048, %s48, [#allocation7], 128, 128, 8
    $region17: #{tpu_custom_call.1} parent=1 // pred_fallthru
      _
    // Predicated region
    $region18: #{tpu_custom_call.1} parent=1 // pred_check
      _
    $region19: #{tpu_custom_call.1} parent=1 // pred_check_branch
      %55 = sbr.rel (0) target = $region21
    $region20: #{tpu_custom_call.1} parent=1 // pred_region
      _
    $region21: #{tpu_custom_call.1} parent=1 // pred_fallthru
      _
    // Predicated region
    $region22: #{tpu_custom_call.1} parent=1 // pred_check
      _
    $region23: #{tpu_custom_call.1} parent=1 // pred_check_branch
      %57 = sbr.rel (0) target = $region25
    $region24: #{tpu_custom_call.1} parent=1 // pred_region
      %59 = dma.done [#allocation4], 64
    $region25: #{tpu_custom_call.1} parent=1 // pred_fallthru
      _
    // Predicated region
    $region26: #{tpu_custom_call.1} parent=1 // pred_check
      _
    $region27: #{tpu_custom_call.1} parent=1 // pred_check_branch
      %61 = sbr.rel (0) target = $region29
    $region28: #{tpu_custom_call.1} parent=1 // pred_region
      %63 = dma.done [#allocation7], 2048
    $region29: #{tpu_custom_call.1} parent=1 // pred_fallthru
      _
    // Predicated region
    $region30: #{tpu_custom_call.1} parent=1 // pred_check
      _
    $region31: #{tpu_custom_call.1} parent=1 // pred_check_branch
      %65 = sbr.rel (0) target = $region33
    $region32: #{tpu_custom_call.1} parent=1 // pred_region
      %67 = dma.done [#allocation7], 2048
    $region33: #{tpu_custom_call.1} parent=1 // pred_fallthru
      _
    %p68 = scmp.eq.s32.totalorder 0, 0
    // Predicated region
    $region34: #{tpu_custom_call.1} parent=1 // pred_check
      %p69 = pneg %p68
    $region35: #{tpu_custom_call.1} parent=1 // pred_check_branch
      %71 = sbr.rel (%p69) target = $region37
    $region36: #{tpu_custom_call.1} parent=1 // pred_region
      %72 = vst [vmem:[#allocation2] sm:$0x3] 0.0
    $region37: #{tpu_custom_call.1} parent=1 // pred_fallthru
      _
    %v73 = vld [vmem:[#allocation2] sm:$0x3]
    %v74 = vld [vmem:[#allocation3] sm:$0x3]
    %v75 = vld [vmem:[#allocation3 + $0x2] sm:$0x3]
    %vm76 = vcmask 1041408
    %v77 = vsel %vm76, %v74, 0.0
    %v78 = vrot.slane %v77, 4
    %v79 = vadd.f32 %v77, %v78
    %v80 = vrot.slane %v79, 2
    %v81 = vadd.f32 %v79, %v80
    %v82 = vrot.slane %v81, 1
    %v83 = vadd.f32 %v81, %v82
    %v84 = vsel %vm76, %v75, 0.0
    %v85 = vrot.slane %v84, 4
    %v86 = vadd.f32 %v84, %v85
    %v87 = vrot.slane %v86, 2
    %v88 = vadd.f32 %v86, %v87
    %v89 = vrot.slane %v88, 1
    %v90 = vadd.f32 %v88, %v89
    %vm93 = vcmask 1041409
    %v94 = vsel %vm93, %v90, %v83
    %v96 = vadd.f32 %v73, %v94
    %97 = vst [vmem:[#allocation2] sm:$0x3] %v96
    // Predicated region
    $region38: #{tpu_custom_call.1} parent=1 // pred_check
      %p98 = pneg %p68
    $region39: #{tpu_custom_call.1} parent=1 // pred_check_branch
      %100 = sbr.rel (%p98) target = $region41
    $region40: #{tpu_custom_call.1} parent=1 // pred_region
      %v101 = vld [vmem:[#allocation2] sm:$0x3]
      %v102 = vmul.f32 %v101, 0.125
      %v103 = vld [vmem:[#allocation6] sm:$0xff]
      %v104 = vld [vmem:[#allocation6 + $0x8] sm:$0xff]
      %v105 = vld [vmem:[#allocation6 + $0x10] sm:$0xff]
      %v106 = vld [vmem:[#allocation6 + $0x18] sm:$0xff]
      %v107 = vld [vmem:[#allocation6 + $0x20] sm:$0xff]
      %v108 = vld [vmem:[#allocation6 + $0x28] sm:$0xff]
      %v109 = vld [vmem:[#allocation6 + $0x30] sm:$0xff]
      %v110 = vld [vmem:[#allocation6 + $0x38] sm:$0xff]
      %v111 = vld [vmem:[#allocation6 + $0x40] sm:$0xff]
      %v112 = vld [vmem:[#allocation6 + $0x48] sm:$0xff]
      %v113 = vld [vmem:[#allocation6 + $0x50] sm:$0xff]
      %v114 = vld [vmem:[#allocation6 + $0x58] sm:$0xff]
      %v115 = vld [vmem:[#allocation6 + $0x60] sm:$0xff]
      %v116 = vld [vmem:[#allocation6 + $0x68] sm:$0xff]
      %v117 = vld [vmem:[#allocation6 + $0x70] sm:$0xff]
      %v118 = vld [vmem:[#allocation6 + $0x78] sm:$0xff]
      %v119 = vld [vmem:[%s2] sm:$0x1]
      %v121 = vperm.slane %v119, 0
      %123 = vmatpush.msra.mxu0 %v118
      %124 = vmatpush.msra.mxu0 %v117
      %125 = vmatpush.msra.mxu0 %v116
      %126 = vmatpush.msra.mxu0 %v115
      %127 = vmatpush.msra.mxu0 %v114
      %128 = vmatpush.msra.mxu0 %v113
      %129 = vmatpush.msra.mxu0 %v112
      %130 = vmatpush.msra.mxu0 %v111
      %131 = vmatpush.msra.mxu0 %v110
      %132 = vmatpush.msra.mxu0 %v109
      %133 = vmatpush.msra.mxu0 %v108
      %134 = vmatpush.msra.mxu0 %v107
      %135 = vmatpush.msra.mxu0 %v106
      %136 = vmatpush.msra.mxu0 %v105
      %137 = vmatpush.msra.mxu0 %v104
      %138 = vmatpush.msra.mxu0 %v103
      %139 = vmatmul.f32.gmra.mxu0 %v102
      %v140 = vpop.f32.mrf.mxu0
      %v141 = vadd.f32 %v121, %v140
      %142 = vdwg.mxu0
      %v143 = vmax.f32 %v141, 0.0
      %v144 = vld [vmem:[#allocation8] sm:$0xff]
      %v145 = vld [vmem:[#allocation8 + $0x8] sm:$0xff]
      %v146 = vld [vmem:[#allocation8 + $0x10] sm:$0xff]
      %v147 = vld [vmem:[#allocation8 + $0x18] sm:$0xff]
      %v148 = vld [vmem:[#allocation8 + $0x20] sm:$0xff]
      %v149 = vld [vmem:[#allocation8 + $0x28] sm:$0xff]
      %v150 = vld [vmem:[#allocation8 + $0x30] sm:$0xff]
      %v151 = vld [vmem:[#allocation8 + $0x38] sm:$0xff]
      %v152 = vld [vmem:[#allocation8 + $0x40] sm:$0xff]
      %v153 = vld [vmem:[#allocation8 + $0x48] sm:$0xff]
      %v154 = vld [vmem:[#allocation8 + $0x50] sm:$0xff]
      %v155 = vld [vmem:[#allocation8 + $0x58] sm:$0xff]
      %v156 = vld [vmem:[#allocation8 + $0x60] sm:$0xff]
      %v157 = vld [vmem:[#allocation8 + $0x68] sm:$0xff]
      %v158 = vld [vmem:[#allocation8 + $0x70] sm:$0xff]
      %v159 = vld [vmem:[#allocation8 + $0x78] sm:$0xff]
      %v160 = vld [vmem:[%s4] sm:$0x1]
      %v162 = vperm.slane %v160, 0
      %164 = vmatpush.msra.mxu0 %v159
      %165 = vmatpush.msra.mxu0 %v158
      %166 = vmatpush.msra.mxu0 %v157
      %167 = vmatpush.msra.mxu0 %v156
      %168 = vmatpush.msra.mxu0 %v155
      %169 = vmatpush.msra.mxu0 %v154
      %170 = vmatpush.msra.mxu0 %v153
      %171 = vmatpush.msra.mxu0 %v152
      %172 = vmatpush.msra.mxu0 %v151
      %173 = vmatpush.msra.mxu0 %v150
      %174 = vmatpush.msra.mxu0 %v149
      %175 = vmatpush.msra.mxu0 %v148
      %176 = vmatpush.msra.mxu0 %v147
      %177 = vmatpush.msra.mxu0 %v146
      %178 = vmatpush.msra.mxu0 %v145
      %179 = vmatpush.msra.mxu0 %v144
      %180 = vmatmul.f32.gmra.mxu0 %v143
      %v181 = vpop.f32.mrf.mxu0
      %v182 = vadd.f32 %v162, %v181
      %183 = vdwg.mxu0
      %184 = vst [vmem:[#allocation9] sm:$0x3] %v182
    $region41: #{tpu_custom_call.1} parent=1 // pred_fallthru
      _
    // Predicated region
    $region42: #{tpu_custom_call.1} parent=1 // pred_check
      _
    $region43: #{tpu_custom_call.1} parent=1 // pred_check_branch
      %186 = sbr.rel (0) target = $region45
    $region44: #{tpu_custom_call.1} parent=1 // pred_region
      %188 = vsyncadd [#allocation5], 0
      %s190 = sshll.u32 [#allocation9], 4
      %s191 = int_to_ptr.vmem [resolvable:$true] %s190
      %s192 = sshll.u32 %s5, 4
      %s193 = int_to_ptr.hbm [resolvable:$true] %s192
      %195 = dma.vmem_to_hbm [thread:$0]  %s191, 32, %s193, [#allocation5]
    $region45: #{tpu_custom_call.1} parent=1 // pred_fallthru
      _
    // Predicated region
    $region46: #{tpu_custom_call.1} parent=1 // pred_check
      _
    $region47: #{tpu_custom_call.1} parent=1 // pred_check_branch
      %197 = sbr.rel (0) target = $region49
    $region48: #{tpu_custom_call.1} parent=1 // pred_region
      %199 = dma.done [#allocation5], 32
    $region49: #{tpu_custom_call.1} parent=1 // pred_fallthru
      _
    %200 = vsyncpa [#allocation4], 1
    %201 = vsyncpa [#allocation7], 1
    %202 = vsyncpa [#allocation5], 1

</llo_original>
